<compile_context>
chip_gen: v7x
topology: tpu7x:2x2x1
jax: 0.10.0
libtpu: 0.0.40
codegen_flags: <defaults>
</compile_context>

<pallas_src>
import functools

import jax
import jax.numpy as jnp
from jax.experimental import pallas as pl
from jax.experimental.pallas import tpu as pltpu


# --------------------------------------------------------------------------
# Tiling / VMEM helpers
# --------------------------------------------------------------------------

def _pick_tile(dim, prefs, min_steps=1):
    """Largest preferred tile dividing `dim` with >= min_steps grid steps,
    else any dividing preferred tile, else the full dim (legal: full-dim
    blocks bypass the (8,128) rule)."""
    for p in prefs:
        if dim % p == 0 and dim // p >= min_steps:
            return p
    for p in prefs:
        if dim % p == 0:
            return p
    return dim


_M_TILE_PREFS = (512, 256, 128, 64, 32, 16, 8)


def _vmem_limit_bytes():
    """Generation-aware VMEM budget: ~100 MiB on v5e/v6e, ~48 MiB on v7x."""
    try:
        cap = pltpu.get_tpu_info().vmem_capacity_bytes
    except Exception:  # pragma: no cover - conservative fallback
        cap = 64 * 1024 * 1024
    return int(min(max(cap - 16 * 1024 * 1024, 32 * 1024 * 1024),
                   100 * 1024 * 1024))


_VMEM_LIMIT = _vmem_limit_bytes()


# --------------------------------------------------------------------------
# Single-pass linear: y = act(x @ W + b), full weight resident in VMEM
# --------------------------------------------------------------------------

def _linear_kernel(x_ref, w_ref, b_ref, o_ref, *, act):
    y = jnp.dot(x_ref[...], w_ref[...],
                preferred_element_type=jnp.float32) + b_ref[...]
    if act == "relu":
        y = jnp.maximum(y, 0.0)
    elif act == "gelu":
        y = jax.nn.gelu(y, approximate=True)
    elif act == "tanh":
        y = jnp.tanh(y)
    o_ref[...] = y.astype(o_ref.dtype)


def pallas_linear(x, w, b, act="none", out_dtype=jnp.bfloat16):
    """x:[M,K] bf16, w:[K,N] bf16 (fully VMEM-resident), b:[N] f32 -> [M,N]."""
    if x.dtype != jnp.bfloat16:
        x = x.astype(jnp.bfloat16)          # safety net; normally already bf16
    if w.dtype != jnp.bfloat16:
        w = w.astype(jnp.bfloat16)
    M, K = x.shape
    N = w.shape[1]
    tm = _pick_tile(M, _M_TILE_PREFS, min_steps=2)
    bias = b.reshape(1, N).astype(jnp.float32)

    return pl.pallas_call(
        functools.partial(_linear_kernel, act=act),
        out_shape=jax.ShapeDtypeStruct((M, N), out_dtype),
        grid=(M // tm,),
        in_specs=[
            pl.BlockSpec((tm, K), lambda i: (i, 0)),
            pl.BlockSpec((K, N), lambda i: (0, 0)),   # weight fetched once
            pl.BlockSpec((1, N), lambda i: (0, 0)),
        ],
        out_specs=pl.BlockSpec((tm, N), lambda i: (i, 0)),
        compiler_params=pltpu.CompilerParams(
            dimension_semantics=("parallel",),
            vmem_limit_bytes=_VMEM_LIMIT),
    )(x, w, bias)


# --------------------------------------------------------------------------
# Fused linear + residual-add + LayerNorm (N == H projections)
# --------------------------------------------------------------------------

def _linear_add_ln_kernel(x_ref, w_ref, b_ref, r_ref, g_ref, bb_ref, o_ref,
                          *, eps):
    y = jnp.dot(x_ref[...], w_ref[...],
                preferred_element_type=jnp.float32) + b_ref[...]
    y = y + r_ref[...].astype(jnp.float32)
    mu = jnp.mean(y, axis=-1, keepdims=True)
    var = jnp.mean((y - mu) ** 2, axis=-1, keepdims=True)
    inv = jax.lax.rsqrt(var + eps)
    o_ref[...] = (((y - mu) * inv) * g_ref[...] + bb_ref[...]).astype(o_ref.dtype)


def pallas_linear_add_ln(x, w, b, residual, gamma, beta, eps=1e-12,
                         out_dtype=jnp.bfloat16):
    """LayerNorm(x @ W + b + residual) with LN fused into the matmul epilogue."""
    if x.dtype != jnp.bfloat16:
        x = x.astype(jnp.bfloat16)
    if w.dtype != jnp.bfloat16:
        w = w.astype(jnp.bfloat16)
    M, K = x.shape
    N = w.shape[1]
    tm = _pick_tile(M, _M_TILE_PREFS, min_steps=2)
    bias = b.reshape(1, N).astype(jnp.float32)
    g2 = gamma.reshape(1, N).astype(jnp.float32)
    bb2 = beta.reshape(1, N).astype(jnp.float32)

    return pl.pallas_call(
        functools.partial(_linear_add_ln_kernel, eps=eps),
        out_shape=jax.ShapeDtypeStruct((M, N), out_dtype),
        grid=(M // tm,),
        in_specs=[
            pl.BlockSpec((tm, K), lambda i: (i, 0)),
            pl.BlockSpec((K, N), lambda i: (0, 0)),
            pl.BlockSpec((1, N), lambda i: (0, 0)),
            pl.BlockSpec((tm, N), lambda i: (i, 0)),
            pl.BlockSpec((1, N), lambda i: (0, 0)),
            pl.BlockSpec((1, N), lambda i: (0, 0)),
        ],
        out_specs=pl.BlockSpec((tm, N), lambda i: (i, 0)),
        compiler_params=pltpu.CompilerParams(
            dimension_semantics=("parallel",),
            vmem_limit_bytes=_VMEM_LIMIT),
    )(x, w, bias, residual, g2, bb2)


# --------------------------------------------------------------------------
# Standalone LayerNorm (embedding LN only), row-tiled, bf16 output
# --------------------------------------------------------------------------

def _ln_kernel(x_ref, g_ref, b_ref, o_ref, *, eps):
    x = x_ref[...]
    mu = jnp.mean(x, axis=-1, keepdims=True)
    var = jnp.mean((x - mu) ** 2, axis=-1, keepdims=True)
    inv = jax.lax.rsqrt(var + eps)
    o_ref[...] = (((x - mu) * inv) * g_ref[...] + b_ref[...]).astype(o_ref.dtype)


def pallas_layernorm(x2d, gamma, beta, eps=1e-12, out_dtype=jnp.bfloat16):
    M, H = x2d.shape
    tm = _pick_tile(M, _M_TILE_PREFS, min_steps=2)
    row_spec = pl.BlockSpec((tm, H), lambda i: (i, 0))
    vec_spec = pl.BlockSpec((1, H), lambda i: (0, 0))
    return pl.pallas_call(
        functools.partial(_ln_kernel, eps=eps),
        out_shape=jax.ShapeDtypeStruct((M, H), out_dtype),
        grid=(M // tm,),
        in_specs=[row_spec, vec_spec, vec_spec],
        out_specs=row_spec,
        compiler_params=pltpu.CompilerParams(
            dimension_semantics=("parallel",),
            vmem_limit_bytes=_VMEM_LIMIT),
    )(x2d.astype(jnp.float32), gamma.reshape(1, H).astype(jnp.float32),
      beta.reshape(1, H).astype(jnp.float32))


# --------------------------------------------------------------------------
# Attention: per-batch kernel, q/k/v selected from fused [B,S,3H] by BlockSpec,
# heads sliced inside, per-head PV written to a [S,H] VMEM scratch
# --------------------------------------------------------------------------

def _attention_kernel(q_ref, k_ref, v_ref, bias_ref, o_ref, ctx_ref,
                      *, scale, nh, d):
    bias = bias_ref[0]                      # [1, S] additive mask bias (f32)
    for h in range(nh):                     # static head loop; static slices
        lo, hi = h * d, (h + 1) * d
        qh = q_ref[0, :, lo:hi] * scale     # fold 1/sqrt(d) into [S,d] q slice
        kh = k_ref[0, :, lo:hi]
        vh = v_ref[0, :, lo:hi]
        # contract last dims -> no explicit k transpose/relayout
        s = jax.lax.dot_general(
            qh, kh, (((1,), (1,)), ((), ())),
            preferred_element_type=jnp.float32)
        s = s + bias                        # [S,S] + [1,S] broadcast
        m = jnp.max(s, axis=-1, keepdims=True)
        p = jnp.exp(s - m)
        l = jnp.sum(p, axis=-1, keepdims=True)
        p = p * pl.reciprocal(l, approx=True)
        ctx_ref[:, lo:hi] = jnp.dot(p.astype(vh.dtype), vh,
                                    preferred_element_type=jnp.float32)
    # one lane-dense cast + store of the full [S, H] context
    o_ref[0] = ctx_ref[...].astype(o_ref.dtype)


def pallas_attention(qkv, mask_bias, scale, nh):
    """qkv: [B, S, 3H] bf16, mask_bias: [B, 1, S] f32 -> context [B, S, H] bf16."""
    B, S, H3 = qkv.shape
    H = H3 // 3
    d = H // nh
    q_spec = pl.BlockSpec((1, S, H), lambda b: (b, 0, 0))
    k_spec = pl.BlockSpec((1, S, H), lambda b: (b, 0, 1))
    v_spec = pl.BlockSpec((1, S, H), lambda b: (b, 0, 2))
    bias_spec = pl.BlockSpec((1, 1, S), lambda b: (b, 0, 0))
    out_spec = pl.BlockSpec((1, S, H), lambda b: (b, 0, 0))
    # TODO(synk): for B == 1 on v7x add a query-tile grid axis so both
    #             TensorCores are used; for S >= ~1k add KV-block tiling.
    return pl.pallas_call(
        functools.partial(_attention_kernel, scale=scale, nh=nh, d=d),
        out_shape=jax.ShapeDtypeStruct((B, S, H), jnp.bfloat16),
        grid=(B,),
        in_specs=[q_spec, k_spec, v_spec, bias_spec],
        out_specs=out_spec,
        scratch_shapes=[pltpu.VMEM((S, H), jnp.float32)],
        compiler_params=pltpu.CompilerParams(
            dimension_semantics=("parallel",),
            vmem_limit_bytes=_VMEM_LIMIT),
    )(qkv, qkv, qkv, mask_bias)


# --------------------------------------------------------------------------
# Fused select-classifier tail: FF(relu) -> FF(relu) -> Linear(2) -> CE(sum)
# --------------------------------------------------------------------------

def _select_head_kernel(feat_ref, w1_ref, b1_ref, w2_ref, b2_ref,
                        w3_ref, b3_ref, oh_ref, logits_ref, loss_ref):
    h = jnp.dot(feat_ref[...], w1_ref[...],
                preferred_element_type=jnp.float32) + b1_ref[...]
    h = jnp.maximum(h, 0.0)
    h = jnp.dot(h, w2_ref[...],
                preferred_element_type=jnp.float32) + b2_ref[...]
    h = jnp.maximum(h, 0.0)
    logits = jnp.dot(h, w3_ref[...],
                     preferred_element_type=jnp.float32) + b3_ref[...]
    logits_ref[...] = logits
    # CrossEntropyLoss(reduction='sum') with one-hot labels
    m = jnp.max(logits, axis=-1, keepdims=True)
    lse = m + jnp.log(jnp.sum(jnp.exp(logits - m), axis=-1, keepdims=True))
    loss_ref[...] = jnp.sum(oh_ref[...] * (lse - logits)).reshape(1, 1)


def pallas_select_head(feat, w1, b1, w2, b2, w3, b3, onehot):
    """feat:[N,F] -> (logits [N,2], summed CE loss scalar).  Tiny -> one launch."""
    N, F = feat.shape
    hs = w1.shape[1]
    full = lambda shape: pl.BlockSpec(shape, lambda i: tuple(0 for _ in shape))
    logits, loss = pl.pallas_call(
        _select_head_kernel,
        out_shape=(jax.ShapeDtypeStruct((N, 2), jnp.float32),
                   jax.ShapeDtypeStruct((1, 1), jnp.float32)),
        grid=(1,),
        in_specs=[
            full((N, F)),
            full((F, hs)), full((1, hs)),
            full((hs, hs)), full((1, hs)),
            full((hs, 2)), full((1, 2)),
            full((N, 2)),
        ],
        out_specs=(full((N, 2)), full((1, 1))),
        compiler_params=pltpu.CompilerParams(vmem_limit_bytes=_VMEM_LIMIT),
    )(feat, w1, b1.reshape(1, hs), w2, b2.reshape(1, hs),
      w3, b3.reshape(1, 2), onehot)
    return logits, loss[0, 0]


# --------------------------------------------------------------------------
# Model (glue + Pallas kernels)
# --------------------------------------------------------------------------

def init_params(key, cfg):
    keys = iter(jax.random.split(key, 64))

    def nrm(shape, dtype=jnp.float32):
        return (jax.random.normal(next(keys), shape, jnp.float32)
                * 0.02).astype(dtype)

    H, I, R, hs = cfg["H"], cfg["I"], cfg["R"], cfg["hs"]
    bf = jnp.bfloat16
    params = {
        "word_emb": nrm((cfg["vocab"], H)),
        "pos_emb": nrm((cfg["max_pos"], H)),
        "type_emb": nrm((2, H)),
        "emb_ln_g": jnp.ones((H,), jnp.float32),
        "emb_ln_b": jnp.zeros((H,), jnp.float32),
        "layers": [],
        # bf16 once at init -> no per-call weight casts
        "pooler_w": nrm((H, H), bf), "pooler_b": jnp.zeros((H,), jnp.float32),
        "width_emb": nrm((cfg["max_span_length"] + 1, cfg["width_dim"])),
        # select_classifier: FeedForward(2 layers, ReLU) + Linear(hs, 2)
        "ff1_w": nrm((H + R, hs)), "ff1_b": jnp.zeros((hs,), jnp.float32),
        "ff2_w": nrm((hs, hs)), "ff2_b": jnp.zeros((hs,), jnp.float32),
        "cls_w": nrm((hs, 2)), "cls_b": jnp.zeros((2,), jnp.float32),
    }
    for _ in range(cfg["L"]):
        params["layers"].append({
            # fused QKV projection: [H, 3H]
            "qkv_w": nrm((H, 3 * H), bf),
            "qkv_b": jnp.zeros((3 * H,), jnp.float32),
            "ao_w": nrm((H, H), bf), "ao_b": jnp.zeros((H,), jnp.float32),
            "attn_ln_g": jnp.ones((H,), jnp.float32),
            "attn_ln_b": jnp.zeros((H,), jnp.float32),
            "i_w": nrm((H, I), bf), "i_b": jnp.zeros((I,), jnp.float32),
            "o_w": nrm((I, H), bf), "o_b": jnp.zeros((H,), jnp.float32),
            "out_ln_g": jnp.ones((H,), jnp.float32),
            "out_ln_b": jnp.zeros((H,), jnp.float32),
        })
    return params


def bert_forward(params, token_ids, attn_mask, cfg):
    """Minimal BertModel: embeddings -> L encoder layers -> pooler."""
    B, S = token_ids.shape
    H, nh = cfg["H"], cfg["nh"]
    d = H // nh
    scale = 1.0 / float(d) ** 0.5

    pos_ids = jnp.arange(S)
    emb = (params["word_emb"][token_ids]
           + params["pos_emb"][pos_ids][None, :, :]
           + params["type_emb"][0][None, None, :])      # token_type_ids = 0
    x = pallas_layernorm(emb.reshape(B * S, H),
                         params["emb_ln_g"], params["emb_ln_b"])  # bf16

    # extended attention mask: (1 - mask) * -10000, kept as [B, 1, S]
    mask_bias = ((1.0 - attn_mask.astype(jnp.float32)) * -10000.0)[:, None, :]

    for layer in params["layers"]:
        # fused QKV projection, fed straight into attention as [B, S, 3H]
        qkv = pallas_linear(x, layer["qkv_w"], layer["qkv_b"])    # bf16 [B*S,3H]
        ctx = pallas_attention(qkv.reshape(B, S, 3 * H),
                               mask_bias, scale, nh)              # bf16 [B,S,H]
        # attention output projection + residual + LayerNorm, fused
        x = pallas_linear_add_ln(ctx.reshape(B * S, H),
                                 layer["ao_w"], layer["ao_b"],
                                 residual=x,
                                 gamma=layer["attn_ln_g"],
                                 beta=layer["attn_ln_b"])         # bf16

        inter = pallas_linear(x, layer["i_w"], layer["i_b"], act="gelu")
        # FFN output projection + residual + LayerNorm, fused
        x = pallas_linear_add_ln(inter, layer["o_w"], layer["o_b"],
                                 residual=x,
                                 gamma=layer["out_ln_g"],
                                 beta=layer["out_ln_b"])          # bf16

    seq_out = x.reshape(B, S, H)
    pooled = pallas_linear(seq_out[:, 0, :],
                           params["pooler_w"], params["pooler_b"],
                           act="tanh", out_dtype=jnp.float32)
    return seq_out, pooled


def get_spans_embedding(params, token_ids, attn_mask, spans, cfg):
    seq_out, pooled = bert_forward(params, token_ids, attn_mask, cfg)
    H = cfg["H"]
    starts = spans[:, :, 0]
    ends = spans[:, :, 1]
    widths = spans[:, :, 2]
    start_emb = jnp.take_along_axis(
        seq_out, jnp.broadcast_to(starts[:, :, None],
                                  starts.shape + (H,)), axis=1)
    end_emb = jnp.take_along_axis(
        seq_out, jnp.broadcast_to(ends[:, :, None],
                                  ends.shape + (H,)), axis=1)
    width_emb = params["width_emb"][widths]
    spans_emb = jnp.concatenate([start_emb.astype(jnp.float32),
                                 end_emb.astype(jnp.float32),
                                 width_emb], axis=-1)
    return spans_emb, seq_out, pooled


def encoder_select_forward(params, token_ids, attn_mask, spans,
                           class_logits, labels_onehot, cfg):
    _spans_emb, _seq_out, pooled = get_spans_embedding(
        params, token_ids, attn_mask, spans, cfg)
    B, T, R = class_logits.shape
    H = cfg["H"]
    pooled_rep = jnp.broadcast_to(pooled[:, None, :], (B, T, H))
    feat = jnp.concatenate([pooled_rep, class_logits], axis=-1)   # [B, T, H+R]
    flat = feat.reshape(B * T, H + R)
    logits, loss = pallas_select_head(
        flat, params["ff1_w"], params["ff1_b"],
        params["ff2_w"], params["ff2_b"],
        params["cls_w"], params["cls_b"], labels_onehot)
    return logits.reshape(B, T, 2), loss


def get_mask(data_list, class_logits, pad_token_id=0):
    """Python/JAX glue replicating SAFW_Model_SELECT.get_mask."""
    pred = jnp.argmax(jax.nn.softmax(class_logits, axis=-1), axis=2)
    max_tokens = max(int(s["id"].shape[0]) for s in data_list)
    max_spans = max(int(s["spans"].shape[0]) for s in data_list)

    toks, tmasks, spans, slabels, smasks, sel_labels = [], [], [], [], [], []
    for i, sample in enumerate(data_list):
        sel = [jnp.any(pred[i, t] == sample["relation_id"]).astype(jnp.int32)
               for t in range(pred.shape[1])]
        sel_labels.append(jnp.stack(sel))

        L = int(sample["id"].shape[0])
        toks.append(jnp.concatenate(
            [sample["id"],
             jnp.full((max_tokens - L,), pad_token_id, jnp.int32)]))
        tmasks.append(jnp.concatenate(
            [jnp.ones((L,), jnp.int32), jnp.zeros((max_tokens - L,), jnp.int32)]))

        ns = int(sample["spans"].shape[0])
        spans.append(jnp.concatenate(
            [sample["spans"],
             jnp.zeros((max_spans - ns, sample["spans"].shape[1]), jnp.int32)],
            axis=0))
        slabels.append(jnp.concatenate(
            [sample["span_labels"], jnp.zeros((max_spans - ns,), jnp.int32)]))
        smasks.append(jnp.concatenate(
            [jnp.ones((ns,), jnp.int32), jnp.zeros((max_spans - ns,), jnp.int32)]))

    return (jnp.stack(toks), jnp.stack(tmasks), jnp.stack(spans),
            jnp.stack(slabels), jnp.stack(smasks), jnp.stack(sel_labels))


def safw_forward(params, data_list, class_logits, cfg):
    (batch_tokens, batch_mask, batch_spans, _batch_span_labels,
     _batch_span_mask, batch_select_labels) = get_mask(data_list, class_logits)

    # Select_none_span_reweighting_in_BF == 0 -> unweighted CE, reduction='sum'
    onehot = jax.nn.one_hot(batch_select_labels.reshape(-1), 2,
                            dtype=jnp.float32)

    select_logits, loss = encoder_select_forward(
        params, batch_tokens, batch_mask, batch_spans, class_logits,
        onehot, cfg)

    return {"loss_total": loss,
            "select_logits": select_logits,
            "select_labels": batch_select_labels}


# --------------------------------------------------------------------------
# Example run
# --------------------------------------------------------------------------

if __name__ == "__main__":
    # H=128 keeps the q/k/v column-block selection from [B,S,3H] lane-aligned
    # (block last dim must be a multiple of 128 when not the full array dim).
    cfg = dict(vocab=64, H=128, nh=2, L=2, I=256, max_pos=16, R=5,
               max_span_length=8, width_dim=16, hs=32)

    key = jax.random.PRNGKey(0)
    pkey, dkey = jax.random.split(key)
    params = init_params(pkey, cfg)

    k1, k2, k3 = jax.random.split(dkey, 3)
    B, T = 2, 4
    class_logits = jax.random.normal(k1, (B, T, cfg["R"]), jnp.float32)

    data_list = [
        {"id": jax.random.randint(k2, (8,), 0, cfg["vocab"], jnp.int32),
         "spans": jnp.array([[0, 2, 2], [1, 3, 2], [2, 5, 3],
                             [4, 6, 2], [0, 7, 7]], jnp.int32),
         "span_labels": jnp.array([1, 0, 2, 0, 1], jnp.int32),
         "relation_id": jnp.array([0, 2], jnp.int32)},
        {"id": jax.random.randint(k3, (6,), 0, cfg["vocab"], jnp.int32),
         "spans": jnp.array([[0, 1, 1], [2, 4, 2], [3, 5, 2]], jnp.int32),
         "span_labels": jnp.array([0, 1, 0], jnp.int32),
         "relation_id": jnp.array([1], jnp.int32)},
    ]

    out = safw_forward(params, data_list, class_logits, cfg)
    out = jax.tree_util.tree_map(jax.block_until_ready, out)
    assert out["select_logits"].shape == (B, T, 2)
    assert out["select_labels"].shape == (B, T)
    assert out["loss_total"].shape == ()
    print("KERNEL_OK")
</pallas_src>

<mosaic_0001>
module attributes {stable_mosaic.version = 11 : i64} {
  func.func @_ln_kernel(%arg0: i32, %arg1: memref<8x128xf32, #tpu.memory_space<vmem>>, %arg2: memref<1x128xf32, #tpu.memory_space<vmem>>, %arg3: memref<1x128xf32, #tpu.memory_space<vmem>>, %arg4: memref<8x128xbf16, #tpu.memory_space<vmem>>) attributes {dimension_semantics = [#tpu.dimension_semantics<parallel>], iteration_bounds = array<i64: 2>, scalar_prefetch = 0 : i64, scratch_operands = 0 : i64, tpu.core_type = #tpu.core_type<tc>, window_params = [{transform_indices = @transform_0, window_bounds = array<i64: 8, 128>}, {pipeline_mode = #tpu.pipeline_mode<synchronous>, transform_indices = @transform_1, window_bounds = array<i64: 1, 128>}, {pipeline_mode = #tpu.pipeline_mode<synchronous>, transform_indices = @transform_2, window_bounds = array<i64: 1, 128>}, {transform_indices = @transform_3, window_bounds = array<i64: 8, 128>}]} {
    %c0 = arith.constant 0 : index
    %c0_0 = arith.constant 0 : index
    %0 = vector.load %arg1[%c0, %c0_0] : memref<8x128xf32, #tpu.memory_space<vmem>>, vector<8x128xf32>
    %cst = arith.constant dense<0.000000e+00> : vector<8xf32>
    %1 = vector.multi_reduction <add>, %0, %cst [1] : vector<8x128xf32> to vector<8xf32>
    %2 = vector.shape_cast %1 : vector<8xf32> to vector<8x1xf32>
    %cst_1 = arith.constant 1.280000e+02 : f32
    %3 = vector.broadcast %cst_1 : f32 to vector<8x1xf32>
    %4 = arith.divf %2, %3 : vector<8x1xf32>
    %5 = vector.broadcast %4 : vector<8x1xf32> to vector<8x128xf32>
    %6 = arith.subf %0, %5 : vector<8x128xf32>
    %7 = arith.mulf %6, %6 : vector<8x128xf32>
    %cst_2 = arith.constant dense<0.000000e+00> : vector<8xf32>
    %8 = vector.multi_reduction <add>, %7, %cst_2 [1] : vector<8x128xf32> to vector<8xf32>
    %9 = vector.shape_cast %8 : vector<8xf32> to vector<8x1xf32>
    %cst_3 = arith.constant 1.280000e+02 : f32
    %10 = vector.broadcast %cst_3 : f32 to vector<8x1xf32>
    %11 = arith.divf %9, %10 : vector<8x1xf32>
    %cst_4 = arith.constant 9.99999996E-13 : f32
    %12 = vector.broadcast %cst_4 : f32 to vector<8x1xf32>
    %13 = arith.addf %11, %12 : vector<8x1xf32>
    %14 = math.rsqrt %13 : vector<8x1xf32>
    %15 = vector.broadcast %4 : vector<8x1xf32> to vector<8x128xf32>
    %16 = arith.subf %0, %15 : vector<8x128xf32>
    %17 = vector.broadcast %14 : vector<8x1xf32> to vector<8x128xf32>
    %18 = arith.mulf %16, %17 : vector<8x128xf32>
    %c0_5 = arith.constant 0 : index
    %c0_6 = arith.constant 0 : index
    %19 = vector.load %arg2[%c0_5, %c0_6] : memref<1x128xf32, #tpu.memory_space<vmem>>, vector<1x128xf32>
    %20 = vector.broadcast %19 : vector<1x128xf32> to vector<8x128xf32>
    %21 = arith.mulf %18, %20 : vector<8x128xf32>
    %c0_7 = arith.constant 0 : index
    %c0_8 = arith.constant 0 : index
    %22 = vector.load %arg3[%c0_7, %c0_8] : memref<1x128xf32, #tpu.memory_space<vmem>>, vector<1x128xf32>
    %23 = vector.broadcast %22 : vector<1x128xf32> to vector<8x128xf32>
    %24 = arith.addf %21, %23 : vector<8x128xf32>
    %25 = arith.truncf %24 : vector<8x128xf32> to vector<8x128xbf16>
    %c0_9 = arith.constant 0 : index
    %c0_10 = arith.constant 0 : index
    %26 = vector.load %arg4[%c0_9, %c0_10] : memref<8x128xbf16, #tpu.memory_space<vmem>>, vector<8x128xbf16>
    tpu.vector_store %arg4[%c0_9, %c0_10], %25 {strides = array<i32>} : memref<8x128xbf16, #tpu.memory_space<vmem>>, vector<8x128xbf16>,
    return
  }
  func.func @transform_0(%arg0: i32) -> (i32, i32) {
    %c0_i32 = arith.constant 0 : i32
    %c0_i32_0 = arith.constant 0 : i32
    return %arg0, %c0_i32 : i32, i32
  }
  func.func @transform_1(%arg0: i32) -> (i32, i32) {
    %c0_i32 = arith.constant 0 : i32
    %c0_i32_0 = arith.constant 0 : i32
    %c0_i32_1 = arith.constant 0 : i32
    return %c0_i32, %c0_i32_0 : i32, i32
  }
  func.func @transform_2(%arg0: i32) -> (i32, i32) {
    %c0_i32 = arith.constant 0 : i32
    %c0_i32_0 = arith.constant 0 : i32
    %c0_i32_1 = arith.constant 0 : i32
    return %c0_i32, %c0_i32_0 : i32, i32
  }
  func.func @transform_3(%arg0: i32) -> (i32, i32) {
    %c0_i32 = arith.constant 0 : i32
    %c0_i32_0 = arith.constant 0 : i32
    return %arg0, %c0_i32 : i32, i32
  }
}

</mosaic_0001>

<llo_original>
// kernel: tpu_custom_call.1
$region0: #{tpu_custom_call.1}
  #allocation0 [shape = 'u32[]', space=smem, size = 0x4, offset = 0x4, fixed_abs, tag = 'smem constant byte address 0x4 - core index']
  #allocation1 [shape = 'u32[144,128]{1,0:T(1,128)}', space=vmem, size = 0x12000, scoped, tag = 'internal scratch']
  %s0 = inlined_call_operand.hbm [shape: f32[16,128], index: 0, kind: input, shape index: {}]
  %s1 = inlined_call_operand.vmem [shape: f32[1,128], index: 1, kind: input, shape index: {}]
  %s2 = inlined_call_operand.vmem [shape: f32[1,128], index: 2, kind: input, shape index: {}]
  %s3 = inlined_call_operand.hbm [shape: bf16[16,128], index: 3, kind: output, shape index: {}]
  %s4 = sld [smem:[#allocation0]]
  $region49: #{tpu_custom_call.1} parent=0
    _
  %s6 = ssub.s32 1, %s4
  %s7 = scalar_select 0, %s6, %s4
  $region1: #{tpu_custom_call.1} parent=0
    #allocation2 [shape = 'u8[8192]{0}', space=vmem, size = 0x2000, scoped, tag = 'input window, operand 0']
    #allocation3 [shape = 's32[2]{0}', space=sflag, size = 0x8, scoped, tag = 'scoped memory for tpu_custom_call.1']
    #allocation4 [shape = 's32[2]{0}', space=sflag, size = 0x8, scoped, tag = 'scoped memory for tpu_custom_call.1']
    #allocation5 [shape = 'u8[4096]{0}', space=vmem, size = 0x1000, scoped, tag = 'output window, operand 0']
    %8 = vsyncpa [#allocation3], 0
    %s9 = scalar_lea.sflag [#allocation3], 1
    %10 = vsyncpa %s9, 0
    %11 = vsyncpa [#allocation4], 0
    %s12 = scalar_lea.sflag [#allocation4], 1
    %13 = vsyncpa %s12, 0
    loop: start=0, step=1, limit=4
    $region2: #{tpu_custom_call.1} parent=1 // loop_pre_header
      _
    $region3: #{tpu_custom_call.1} parent=1 // loop_header
      %s15 = sphi 0, %s19
      %p16 = scmp.ge.s32.totalorder %s15, 4
      %s25 = sphi 0, %s27
      %s28 = sphi 0, %s25
      %s29 = sphi 0, %s28
      %s45 = sphi 0, %s29
      %s49 = sphi 0, %s49
      %s51 = sphi 0, %s49
      %s52 = sphi 0, %s51
      %s66 = sphi 0, %s52
      %s70 = sphi 0, %s70
      %s72 = sphi 0, %s70
      %s73 = sphi 0, %s72
      %s87 = sphi 0, %s73
      %s93 = sphi 0, %s95
      %s96 = sphi 0, %s93
      %s97 = sphi 0, %s96
      %s113 = sphi 0, %s97
    $region4: #{tpu_custom_call.1} parent=1 // loop_header_branch
      %18 = sbr.rel (%p16) target = $region8
    $region5: #{tpu_custom_call.1} parent=1 // loop_body
      %s20 = ssub.s32 %s15, 1
      %s21 = ssub.s32 %s15, 2
      %s22 = sadd.s32 %s15, 1
      %s23 = ssub.s32 %s15, %s22
      %p24 = scmp.eq.s32.totalorder %s23, 0
      %s26 = sadd.s32 %s25, 1
      %s27 = scalar_select %p24, %s25, %s26
      %p30 = pneg %p24
      %p31 = scmp.eq.s32.totalorder %s15, 1
      %p32 = por %p30, %p31
      %p33 = scmp.ne.s32.totalorder %s25, %s28
      %p34 = scmp.eq.s32.totalorder %s15, 0
      %p35 = por %p33, %p34
      %p36 = scmp.ne.s32.totalorder %s25, %s28
      %p37 = scmp.eq.s32.totalorder %s20, 1
      %p38 = por %p36, %p37
      %p39 = scmp.ne.s32.totalorder %s28, %s29
      %p40 = scmp.eq.s32.totalorder %s20, 0
      %p41 = por %p39, %p40
      %p42 = scmp.ne.s32.totalorder %s28, %s29
      %p43 = scmp.eq.s32.totalorder %s21, 1
      %p44 = por %p42, %p43
      %p46 = scmp.ne.s32.totalorder %s29, %s45
      %p47 = scmp.eq.s32.totalorder %s21, 0
      %p48 = por %p46, %p47
      %s50 = sadd.s32 %s49, 1
      %p53 = scmp.eq.s32.totalorder %s15, 1
      %p54 = scmp.ne.s32.totalorder %s49, %s51
      %p55 = scmp.eq.s32.totalorder %s15, 0
      %p56 = por %p54, %p55
      %p57 = scmp.ne.s32.totalorder %s49, %s51
      %p58 = scmp.eq.s32.totalorder %s20, 1
      %p59 = por %p57, %p58
      %p60 = scmp.ne.s32.totalorder %s51, %s52
      %p61 = scmp.eq.s32.totalorder %s20, 0
      %p62 = por %p60, %p61
      %p63 = scmp.ne.s32.totalorder %s51, %s52
      %p64 = scmp.eq.s32.totalorder %s21, 1
      %p65 = por %p63, %p64
      %p67 = scmp.ne.s32.totalorder %s52, %s66
      %p68 = scmp.eq.s32.totalorder %s21, 0
      %p69 = por %p67, %p68
      %s71 = sadd.s32 %s70, 1
      %p74 = scmp.eq.s32.totalorder %s15, 1
      %p75 = scmp.ne.s32.totalorder %s70, %s72
      %p76 = scmp.eq.s32.totalorder %s15, 0
      %p77 = por %p75, %p76
      %p78 = scmp.ne.s32.totalorder %s70, %s72
      %p79 = scmp.eq.s32.totalorder %s20, 1
      %p80 = por %p78, %p79
      %p81 = scmp.ne.s32.totalorder %s72, %s73
      %p82 = scmp.eq.s32.totalorder %s20, 0
      %p83 = por %p81, %p82
      %p84 = scmp.ne.s32.totalorder %s72, %s73
      %p85 = scmp.eq.s32.totalorder %s21, 1
      %p86 = por %p84, %p85
      %p88 = scmp.ne.s32.totalorder %s73, %s87
      %p89 = scmp.eq.s32.totalorder %s21, 0
      %p90 = por %p88, %p89
      %s91 = ssub.s32 %s15, %s22
      %p92 = scmp.eq.s32.totalorder %s91, 0
      %s94 = sadd.s32 %s93, 1
      %s95 = scalar_select %p92, %s93, %s94
      %p98 = pneg %p92
      %p99 = scmp.eq.s32.totalorder %s15, 1
      %p100 = por %p98, %p99
      %p101 = scmp.ne.s32.totalorder %s93, %s96
      %p102 = scmp.eq.s32.totalorder %s15, 0
      %p103 = por %p101, %p102
      %p104 = scmp.ne.s32.totalorder %s93, %s96
      %p105 = scmp.eq.s32.totalorder %s20, 1
      %p106 = por %p104, %p105
      %p107 = scmp.ne.s32.totalorder %s96, %s97
      %p108 = scmp.eq.s32.totalorder %s20, 0
      %p109 = por %p107, %p108
      %p110 = scmp.ne.s32.totalorder %s96, %s97
      %p111 = scmp.eq.s32.totalorder %s21, 1
      %p112 = por %p110, %p111
      %p114 = scmp.ne.s32.totalorder %s97, %s113
      %p115 = scmp.eq.s32.totalorder %s21, 0
      %p116 = por %p114, %p115
      %p117 = scmp.le.s32.totalorder 1, %s15
      %p118 = scmp.lt.s32.totalorder %s15, 3
      %p119 = pnand %p117, %p118
      %p120 = pneg %p119
      // Predicated region
      $region9: #{tpu_custom_call.1} parent=5 // pred_check
        _
      $region10: #{tpu_custom_call.1} parent=5 // pred_check_branch
        %122 = sbr.rel (%p119) target = $region12
      $region11: #{tpu_custom_call.1} parent=5 // pred_region
        %s123 = ssub.s32 %s15, 1
        // Predicated region
        $region13: #{tpu_custom_call.1} parent=11 // pred_check
          %p124 = pneg %p62
        $region14: #{tpu_custom_call.1} parent=11 // pred_check_branch
          %126 = sbr.rel (%p124) target = $region16
        $region15: #{tpu_custom_call.1} parent=11 // pred_region
          _
        $region16: #{tpu_custom_call.1} parent=11 // pred_fallthru
          _
        // Predicated region
        $region17: #{tpu_custom_call.1} parent=11 // pred_check
          %p127 = pneg %p83
        $region18: #{tpu_custom_call.1} parent=11 // pred_check_branch
          %129 = sbr.rel (%p127) target = $region20
        $region19: #{tpu_custom_call.1} parent=11 // pred_region
          _
        $region20: #{tpu_custom_call.1} parent=11 // pred_fallthru
          _
      $region12: #{tpu_custom_call.1} parent=5 // pred_fallthru
        _
      %p130 = scmp.lt.s32.totalorder %s15, 2
      // Predicated region
      $region21: #{tpu_custom_call.1} parent=5 // pred_check
        %p131 = pneg %p130
      $region22: #{tpu_custom_call.1} parent=5 // pred_check_branch
        %133 = sbr.rel (%p131) target = $region24
      $region23: #{tpu_custom_call.1} parent=5 // pred_region
        // Predicated region
        $region25: #{tpu_custom_call.1} parent=23 // pred_check
          %p134 = pneg %p35
        $region26: #{tpu_custom_call.1} parent=23 // pred_check_branch
          %136 = sbr.rel (%p134) target = $region28
        $region27: #{tpu_custom_call.1} parent=23 // pred_region
          %s137 = sand.u32 %s25, 1
          %s138 = scalar_lea.sflag [#allocation3], %s137
          %s139 = sand.u32 %s25, 1
          %s140 = smul.addr %s139, 8
          %s141 = scalar_lea.vmem [#allocation2], %s140
          %s143 = ssub.s32 128, 128
          %144 = vsyncadd %s138, %s143
          %s145 = smul.addr %s15, 128
          %s146 = scalar_lea.hbm %s0, %s145
          %s148 = sshll.u32 %s141, 4
          %s149 = int_to_ptr.vmem [resolvable:$true] %s148
          %151 = dma.hbm_to_vmem [thread:$0]  %s146, 128, %s149, %s138
        $region28: #{tpu_custom_call.1} parent=23 // pred_fallthru
          _
      $region24: #{tpu_custom_call.1} parent=5 // pred_fallthru
        _
      %p152 = scmp.le.s32.totalorder 1, %s15
      %p153 = scmp.lt.s32.totalorder %s15, 3
      %p154 = pnand %p152, %p153
      %p155 = pneg %p154
      // Predicated region
      $region29: #{tpu_custom_call.1} parent=5 // pred_check
        _
      $region30: #{tpu_custom_call.1} parent=5 // pred_check_branch
        %157 = sbr.rel (%p154) target = $region32
      $region31: #{tpu_custom_call.1} parent=5 // pred_region
        %s158 = ssub.s32 %s15, 1
        %s159 = sand.u32 %s28, 1
        %s160 = scalar_lea.sflag [#allocation3], %s159
        %s161 = sand.u32 %s28, 1
        %s162 = smul.addr %s161, 8
        %s163 = scalar_lea.vmem [#allocation2], %s162
        // Predicated region
        $region33: #{tpu_custom_call.1} parent=31 // pred_check
          %p164 = pneg %p41
        $region34: #{tpu_custom_call.1} parent=31 // pred_check_branch
          %166 = sbr.rel (%p164) target = $region36
        $region35: #{tpu_custom_call.1} parent=31 // pred_region
          %167 = dma.done %s160, 128
        $region36: #{tpu_custom_call.1} parent=31 // pred_fallthru
          _
        %s168 = sand.u32 %s28, 1
        %s169 = scalar_lea.sflag [#allocation3], %s168
        %s170 = sand.u32 %s28, 1
        %s171 = smul.addr %s170, 8
        %s172 = scalar_lea.vmem [#allocation2], %s171
        %p173 = pneg %p41
        %p174 = pneg %p38
        %p175 = pneg %p62
        %p176 = pneg %p59
        %p177 = pneg %p83
        %p178 = pneg %p80
        %p179 = pneg %p109
        %p180 = pneg %p106
        %s181 = sand.u32 %s96, 1
        %s182 = scalar_lea.sflag [#allocation4], %s181
        %s183 = sand.u32 %s96, 1
        %s184 = smul.addr %s183, 4
        %s185 = scalar_lea.vmem [#allocation5], %s184
        %v186 = vld [vmem:[%s163] sm:$0xff]
        %187 = vadd.xlane.f32.xlu0 %v186
        %v188 = vpop.xlane.xlu0 %187
        %v189 = vrcp.pop 128.0
        %v190 = vmul.f32 %v188, %v189
        %v191 = vsub.f32 %v186, %v190
        %v192 = vmul.f32 %v191, %v191
        %193 = vadd.xlane.f32.xlu0 %v192
        %v194 = vpop.xlane.xlu0 %193
        %v195 = vmul.f32 %v194, %v189
        %v196 = vadd.f32 %v195, 1e-12
        %v197 = vrsqrt.pop %v196
        %v198 = vmul.f32 %v191, %v197
        %v199 = vld [vmem:[%s1] sm:$0x1]
        %v201 = vlaneseq
        %v202 = vshrl.u32 %v201, 7
        %v203 = vsub.s32 0, %v202
        %v204 = vrot.slane %v199, %v203
        %v206 = vmul.f32 %v198, %v204
        %v207 = vld [vmem:[%s2] sm:$0x1]
        %v209 = vlaneseq
        %v210 = vshrl.u32 %v209, 7
        %v211 = vsub.s32 0, %v210
        %v212 = vrot.slane %v207, %v211
        %v214 = vadd.f32 %v206, %v212
        %v215 = vpack.c.bf16 %v214, %v214
        %216 = vst [vmem:[%s185] sm:$0xf] %v215
        %s217 = sand.u32 %s96, 1
        %s218 = scalar_lea.sflag [#allocation4], %s217
        %s219 = sand.u32 %s96, 1
        %s220 = smul.addr %s219, 4
        %s221 = scalar_lea.vmem [#allocation5], %s220
        // Predicated region
        $region37: #{tpu_custom_call.1} parent=31 // pred_check
          %p222 = pneg %p106
        $region38: #{tpu_custom_call.1} parent=31 // pred_check_branch
          %224 = sbr.rel (%p222) target = $region40
        $region39: #{tpu_custom_call.1} parent=31 // pred_region
          %s226 = ssub.s32 64, 64
          %227 = vsyncadd %s218, %s226
          %s228 = smul.addr %s20, 64
          %s229 = scalar_lea.hbm %s3, %s228
          %s231 = sshll.u32 %s221, 4
          %s232 = int_to_ptr.vmem [resolvable:$true] %s231
          %234 = dma.vmem_to_hbm [thread:$0]  %s232, 64, %s229, %s218
        $region40: #{tpu_custom_call.1} parent=31 // pred_fallthru
          _
      $region32: #{tpu_custom_call.1} parent=5 // pred_fallthru
        _
      %p235 = scmp.le.s32.totalorder 2, %s15
      // Predicated region
      $region41: #{tpu_custom_call.1} parent=5 // pred_check
        %p236 = pneg %p235
      $region42: #{tpu_custom_call.1} parent=5 // pred_check_branch
        %238 = sbr.rel (%p236) target = $region44
      $region43: #{tpu_custom_call.1} parent=5 // pred_region
        %s239 = ssub.s32 %s15, 2
        // Predicated region
        $region45: #{tpu_custom_call.1} parent=43 // pred_check
          %p240 = pneg %p112
        $region46: #{tpu_custom_call.1} parent=43 // pred_check_branch
          %242 = sbr.rel (%p240) target = $region48
        $region47: #{tpu_custom_call.1} parent=43 // pred_region
          %s243 = sand.u32 %s97, 1
          %s244 = scalar_lea.sflag [#allocation4], %s243
          %s245 = sand.u32 %s97, 1
          %s246 = smul.addr %s245, 4
          %s247 = scalar_lea.vmem [#allocation5], %s246
          %248 = dma.done %s244, 64
        $region48: #{tpu_custom_call.1} parent=43 // pred_fallthru
          _
      $region44: #{tpu_custom_call.1} parent=5 // pred_fallthru
        _
    $region6: #{tpu_custom_call.1} parent=1 // loop_footer
      %s19 = sadd.s32 1, %s15
    $region7: #{tpu_custom_call.1} parent=1 // loop_footer_branch
      %14 = sbr.rel target = $region3
    $region8: #{tpu_custom_call.1} parent=1 // loop_exit
      _
    %249 = vsyncpa [#allocation3], 1
    %s250 = scalar_lea.sflag [#allocation3], 1
    %251 = vsyncpa %s250, 1
    %252 = vsyncpa [#allocation4], 1
    %s253 = scalar_lea.sflag [#allocation4], 1
    %254 = vsyncpa %s253, 1

</llo_original>
